<compile_context>
chip_gen: v6e
topology: v6e:2x2x1
jax: 0.10.0
libtpu: 0.0.40
codegen_flags: <defaults>
</compile_context>

<pallas_src>
import jax
import jax.numpy as jnp
from jax.experimental import pallas as pl
from jax.experimental.pallas import tpu as pltpu


def _pseudo_rnn_kernel(x_ref, wx_ref, b_ref, wy_ref, out_ref):
    out_size = out_ref.shape[-1]
    x = x_ref[...]                                                # (bt, in)

    # One wide MXU pass: every layer's x-side projection + all biases.
    xp = (jnp.dot(x, wx_ref[...], preferred_element_type=jnp.float32)
          + b_ref[...])                                           # (bt, 6*out)

    # f1: Linear + ReLU
    y = jnp.maximum(xp[:, :out_size], 0.0)

    # f2..f5: x-side slice (already computed) + y-side matmul, ReLU.
    for k in range(4):
        z = xp[:, (k + 1) * out_size:(k + 2) * out_size] + jnp.dot(
            y, wy_ref[k], preferred_element_type=jnp.float32)
        y = jnp.maximum(z, 0.0)

    # f6: Linear + Sigmoid.  exp and approx reciprocal both run on the EUP.
    z = xp[:, 5 * out_size:6 * out_size] + jnp.dot(
        y, wy_ref[4], preferred_element_type=jnp.float32)
    out_ref[...] = pl.reciprocal(1.0 + jnp.exp(-z), approx=True)


def pseudo_rnn_forward(x, packed, *, block_rows=8192):
    """x: (B, input_size) f32.  packed = (wx_all, b_all, wy_all)."""
    wx_all, b_all, wy_all = packed
    batch, in_size = x.shape
    out_size = wy_all.shape[-1]

    # Row tile: multiple of 8 sublanes, capped at block_rows; pad the batch so
    # the grid divides evenly (padded rows are discarded at the end).
    bt = min(block_rows, pl.cdiv(batch, 8) * 8)
    padded = pl.cdiv(batch, bt) * bt
    if padded != batch:
        x = jnp.pad(x, ((0, padded - batch), (0, 0)))

    out = pl.pallas_call(
        _pseudo_rnn_kernel,
        out_shape=jax.ShapeDtypeStruct((padded, out_size), jnp.float32),
        grid_spec=pltpu.PrefetchScalarGridSpec(
            num_scalar_prefetch=0,
            grid=(padded // bt,),
            in_specs=[
                # streamed activations
                pl.BlockSpec((bt, in_size), lambda i: (i, 0)),
                # fused x-side weights / biases / y-side weights: resident
                pl.BlockSpec((in_size, 6 * out_size), lambda i: (0, 0)),
                pl.BlockSpec((1, 6 * out_size), lambda i: (0, 0)),
                pl.BlockSpec((5, out_size, out_size), lambda i: (0, 0, 0)),
            ],
            out_specs=pl.BlockSpec((bt, out_size), lambda i: (i, 0)),
        ),
        compiler_params=pltpu.CompilerParams(
            dimension_semantics=("parallel",),
            vmem_limit_bytes=32 * 1024 * 1024,
        ),
    )(x, wx_all, b_all, wy_all)
    return out[:batch]


def init_torch_params(key, input_size, output_size):
    """nn.Linear-style params: list of (W, b) with W: (out, in), b: (out,)."""
    def linear(k, fan_in, fan_out):
        kw, kb = jax.random.split(k)
        bound = float(1.0 / (fan_in ** 0.5))
        w = jax.random.uniform(kw, (fan_out, fan_in), jnp.float32, -bound, bound)
        b = jax.random.uniform(kb, (fan_out,), jnp.float32, -bound, bound)
        return w, b

    keys = jax.random.split(key, 6)
    params = [linear(keys[0], input_size, output_size)]
    for k in keys[1:]:
        params.append(linear(k, input_size + output_size, output_size))
    return params


def pack_params(torch_params, input_size):
    """Pack nn.Linear params into the fused kernel layout."""
    w1, b1 = torch_params[0]
    wx_cols = [w1.T]                      # (in, out)
    wy_mats = []
    biases = [b1]
    for w, b in torch_params[1:]:
        wt = w.T                          # (in+out, out)
        wx_cols.append(wt[:input_size, :])
        wy_mats.append(wt[input_size:, :])
        biases.append(b)
    wx_all = jnp.concatenate(wx_cols, axis=1)        # (in, 6*out)
    b_all = jnp.concatenate(biases).reshape(1, -1)   # (1, 6*out)
    wy_all = jnp.stack(wy_mats, axis=0)              # (5, out, out)
    return wx_all, b_all, wy_all


def pseudo_rnn_ref(x, torch_params):
    """Pure-JAX reference mirroring the PyTorch module exactly."""
    w1, b1 = torch_params[0]
    y = jnp.maximum(x @ w1.T + b1, 0.0)
    for w, b in torch_params[1:5]:
        y = jnp.maximum(jnp.concatenate([x, y], axis=-1) @ w.T + b, 0.0)
    w6, b6 = torch_params[5]
    z = jnp.concatenate([x, y], axis=-1) @ w6.T + b6
    return jax.nn.sigmoid(z)


if __name__ == "__main__":
    input_size, output_size = 16, 32
    batch = 250  # deliberately not a multiple of the row tile (exercises padding)

    key = jax.random.PRNGKey(0)
    k_x, k_p = jax.random.split(key)
    x = jax.random.normal(k_x, (batch, input_size), dtype=jnp.float32)

    torch_params = init_torch_params(k_p, input_size, output_size)
    packed = pack_params(torch_params, input_size)

    out = pseudo_rnn_forward(x, packed, block_rows=64)  # 4-step batch grid
    out = jax.block_until_ready(out)

    ref = pseudo_rnn_ref(x, torch_params)
    assert out.shape == (batch, output_size)
    # approx reciprocal in the sigmoid epilogue -> slightly loosened tolerance
    assert jnp.allclose(out, ref, atol=5e-3, rtol=5e-3), \
        float(jnp.max(jnp.abs(out - ref)))

    print("KERNEL_OK")
</pallas_src>

<mosaic_0001>
module attributes {stable_mosaic.version = 11 : i64} {
  func.func @_pseudo_rnn_kernel(%arg0: i32, %arg1: memref<64x16xf32, #tpu.memory_space<vmem>>, %arg2: memref<16x192xf32, #tpu.memory_space<vmem>>, %arg3: memref<1x192xf32, #tpu.memory_space<vmem>>, %arg4: memref<5x32x32xf32, #tpu.memory_space<vmem>>, %arg5: memref<64x32xf32, #tpu.memory_space<vmem>>) attributes {dimension_semantics = [#tpu.dimension_semantics<parallel>], iteration_bounds = array<i64: 4>, scalar_prefetch = 0 : i64, scratch_operands = 0 : i64, tpu.core_type = #tpu.core_type<tc>, window_params = [{transform_indices = @transform_0, window_bounds = array<i64: 64, 16>}, {pipeline_mode = #tpu.pipeline_mode<synchronous>, transform_indices = @transform_1, window_bounds = array<i64: 16, 192>}, {pipeline_mode = #tpu.pipeline_mode<synchronous>, transform_indices = @transform_2, window_bounds = array<i64: 1, 192>}, {pipeline_mode = #tpu.pipeline_mode<synchronous>, transform_indices = @transform_3, window_bounds = array<i64: 5, 32, 32>}, {transform_indices = @transform_4, window_bounds = array<i64: 64, 32>}]} {
    %c0 = arith.constant 0 : index
    %c0_0 = arith.constant 0 : index
    %0 = vector.load %arg1[%c0, %c0_0] : memref<64x16xf32, #tpu.memory_space<vmem>>, vector<64x16xf32>
    %c0_1 = arith.constant 0 : index
    %c0_2 = arith.constant 0 : index
    %1 = vector.load %arg2[%c0_1, %c0_2] : memref<16x192xf32, #tpu.memory_space<vmem>>, vector<16x192xf32>
    %cst = arith.constant dense<0.000000e+00> : vector<64x192xf32>
    %2 = tpu.matmul %0, %1, %cst {dimension_numbers = #tpu.dot_dimension_numbers<[1], [0], [0], [1], [0, 0, 1, 1], [], []>} : vector<64x16xf32>, vector<16x192xf32>, vector<64x192xf32> -> vector<64x192xf32>
    %c0_3 = arith.constant 0 : index
    %c0_4 = arith.constant 0 : index
    %3 = vector.load %arg3[%c0_3, %c0_4] : memref<1x192xf32, #tpu.memory_space<vmem>>, vector<1x192xf32>
    %4 = vector.broadcast %3 : vector<1x192xf32> to vector<64x192xf32>
    %5 = arith.addf %2, %4 : vector<64x192xf32>
    %6 = vector.extract_strided_slice %5 {offsets = [0, 0], sizes = [64, 32], strides = [1, 1]} : vector<64x192xf32> to vector<64x32xf32>
    %cst_5 = arith.constant 0.000000e+00 : f32
    %7 = vector.broadcast %cst_5 : f32 to vector<64x32xf32>
    %8 = arith.maximumf %6, %7 : vector<64x32xf32>
    %9 = vector.extract_strided_slice %5 {offsets = [0, 32], sizes = [64, 32], strides = [1, 1]} : vector<64x192xf32> to vector<64x32xf32>
    %c0_6 = arith.constant 0 : index
    %c0_7 = arith.constant 0 : index
    %c0_8 = arith.constant 0 : index
    %10 = vector.load %arg4[%c0_6, %c0_7, %c0_8] : memref<5x32x32xf32, #tpu.memory_space<vmem>>, vector<1x32x32xf32>
    %11 = vector.shape_cast %10 : vector<1x32x32xf32> to vector<32x32xf32>
    %cst_9 = arith.constant dense<0.000000e+00> : vector<64x32xf32>
    %12 = tpu.matmul %8, %11, %cst_9 {dimension_numbers = #tpu.dot_dimension_numbers<[1], [0], [0], [1], [0, 0, 1, 1], [], []>} : vector<64x32xf32>, vector<32x32xf32>, vector<64x32xf32> -> vector<64x32xf32>
    %13 = arith.addf %9, %12 : vector<64x32xf32>
    %cst_10 = arith.constant 0.000000e+00 : f32
    %14 = vector.broadcast %cst_10 : f32 to vector<64x32xf32>
    %15 = arith.maximumf %13, %14 : vector<64x32xf32>
    %16 = vector.extract_strided_slice %5 {offsets = [0, 64], sizes = [64, 32], strides = [1, 1]} : vector<64x192xf32> to vector<64x32xf32>
    %c1 = arith.constant 1 : index
    %c0_11 = arith.constant 0 : index
    %c0_12 = arith.constant 0 : index
    %17 = vector.load %arg4[%c1, %c0_11, %c0_12] : memref<5x32x32xf32, #tpu.memory_space<vmem>>, vector<1x32x32xf32>
    %18 = vector.shape_cast %17 : vector<1x32x32xf32> to vector<32x32xf32>
    %cst_13 = arith.constant dense<0.000000e+00> : vector<64x32xf32>
    %19 = tpu.matmul %15, %18, %cst_13 {dimension_numbers = #tpu.dot_dimension_numbers<[1], [0], [0], [1], [0, 0, 1, 1], [], []>} : vector<64x32xf32>, vector<32x32xf32>, vector<64x32xf32> -> vector<64x32xf32>
    %20 = arith.addf %16, %19 : vector<64x32xf32>
    %cst_14 = arith.constant 0.000000e+00 : f32
    %21 = vector.broadcast %cst_14 : f32 to vector<64x32xf32>
    %22 = arith.maximumf %20, %21 : vector<64x32xf32>
    %23 = vector.extract_strided_slice %5 {offsets = [0, 96], sizes = [64, 32], strides = [1, 1]} : vector<64x192xf32> to vector<64x32xf32>
    %c2 = arith.constant 2 : index
    %c0_15 = arith.constant 0 : index
    %c0_16 = arith.constant 0 : index
    %24 = vector.load %arg4[%c2, %c0_15, %c0_16] : memref<5x32x32xf32, #tpu.memory_space<vmem>>, vector<1x32x32xf32>
    %25 = vector.shape_cast %24 : vector<1x32x32xf32> to vector<32x32xf32>
    %cst_17 = arith.constant dense<0.000000e+00> : vector<64x32xf32>
    %26 = tpu.matmul %22, %25, %cst_17 {dimension_numbers = #tpu.dot_dimension_numbers<[1], [0], [0], [1], [0, 0, 1, 1], [], []>} : vector<64x32xf32>, vector<32x32xf32>, vector<64x32xf32> -> vector<64x32xf32>
    %27 = arith.addf %23, %26 : vector<64x32xf32>
    %cst_18 = arith.constant 0.000000e+00 : f32
    %28 = vector.broadcast %cst_18 : f32 to vector<64x32xf32>
    %29 = arith.maximumf %27, %28 : vector<64x32xf32>
    %30 = vector.extract_strided_slice %5 {offsets = [0, 128], sizes = [64, 32], strides = [1, 1]} : vector<64x192xf32> to vector<64x32xf32>
    %c3 = arith.constant 3 : index
    %c0_19 = arith.constant 0 : index
    %c0_20 = arith.constant 0 : index
    %31 = vector.load %arg4[%c3, %c0_19, %c0_20] : memref<5x32x32xf32, #tpu.memory_space<vmem>>, vector<1x32x32xf32>
    %32 = vector.shape_cast %31 : vector<1x32x32xf32> to vector<32x32xf32>
    %cst_21 = arith.constant dense<0.000000e+00> : vector<64x32xf32>
    %33 = tpu.matmul %29, %32, %cst_21 {dimension_numbers = #tpu.dot_dimension_numbers<[1], [0], [0], [1], [0, 0, 1, 1], [], []>} : vector<64x32xf32>, vector<32x32xf32>, vector<64x32xf32> -> vector<64x32xf32>
    %34 = arith.addf %30, %33 : vector<64x32xf32>
    %cst_22 = arith.constant 0.000000e+00 : f32
    %35 = vector.broadcast %cst_22 : f32 to vector<64x32xf32>
    %36 = arith.maximumf %34, %35 : vector<64x32xf32>
    %37 = vector.extract_strided_slice %5 {offsets = [0, 160], sizes = [64, 32], strides = [1, 1]} : vector<64x192xf32> to vector<64x32xf32>
    %c4 = arith.constant 4 : index
    %c0_23 = arith.constant 0 : index
    %c0_24 = arith.constant 0 : index
    %38 = vector.load %arg4[%c4, %c0_23, %c0_24] : memref<5x32x32xf32, #tpu.memory_space<vmem>>, vector<1x32x32xf32>
    %39 = vector.shape_cast %38 : vector<1x32x32xf32> to vector<32x32xf32>
    %cst_25 = arith.constant dense<0.000000e+00> : vector<64x32xf32>
    %40 = tpu.matmul %36, %39, %cst_25 {dimension_numbers = #tpu.dot_dimension_numbers<[1], [0], [0], [1], [0, 0, 1, 1], [], []>} : vector<64x32xf32>, vector<32x32xf32>, vector<64x32xf32> -> vector<64x32xf32>
    %41 = arith.addf %37, %40 : vector<64x32xf32>
    %cst_26 = arith.constant 0.000000e+00 : f32
    %42 = vector.broadcast %cst_26 : f32 to vector<64x32xf32>
    %43 = arith.subf %42, %41 : vector<64x32xf32>
    %44 = math.exp %43 : vector<64x32xf32>
    %cst_27 = arith.constant 1.000000e+00 : f32
    %45 = vector.broadcast %cst_27 : f32 to vector<64x32xf32>
    %46 = arith.addf %45, %44 : vector<64x32xf32>
    %47 = tpu.reciprocal %46 {approx = true} : vector<64x32xf32> -> vector<64x32xf32>
    %c0_28 = arith.constant 0 : index
    %c0_29 = arith.constant 0 : index
    %48 = vector.load %arg5[%c0_28, %c0_29] : memref<64x32xf32, #tpu.memory_space<vmem>>, vector<64x32xf32>
    tpu.vector_store %arg5[%c0_28, %c0_29], %47 {strides = array<i32>} : memref<64x32xf32, #tpu.memory_space<vmem>>, vector<64x32xf32>,
    return
  }
  func.func @transform_0(%arg0: i32) -> (i32, i32) {
    %c0_i32 = arith.constant 0 : i32
    %c0_i32_0 = arith.constant 0 : i32
    return %arg0, %c0_i32 : i32, i32
  }
  func.func @transform_1(%arg0: i32) -> (i32, i32) {
    %c0_i32 = arith.constant 0 : i32
    %c0_i32_0 = arith.constant 0 : i32
    %c0_i32_1 = arith.constant 0 : i32
    return %c0_i32, %c0_i32_0 : i32, i32
  }
  func.func @transform_2(%arg0: i32) -> (i32, i32) {
    %c0_i32 = arith.constant 0 : i32
    %c0_i32_0 = arith.constant 0 : i32
    %c0_i32_1 = arith.constant 0 : i32
    return %c0_i32, %c0_i32_0 : i32, i32
  }
  func.func @transform_3(%arg0: i32) -> (i32, i32, i32) {
    %c0_i32 = arith.constant 0 : i32
    %c0_i32_0 = arith.constant 0 : i32
    %c0_i32_1 = arith.constant 0 : i32
    %c0_i32_2 = arith.constant 0 : i32
    return %c0_i32, %c0_i32_0, %c0_i32_1 : i32, i32, i32
  }
  func.func @transform_4(%arg0: i32) -> (i32, i32) {
    %c0_i32 = arith.constant 0 : i32
    %c0_i32_0 = arith.constant 0 : i32
    return %arg0, %c0_i32 : i32, i32
  }
}

</mosaic_0001>

<llo_original>
// kernel: tpu_custom_call.1
$region0: #{tpu_custom_call.1}
  #allocation0 [shape = 'u32[]', space=smem, size = 0x4, offset = 0x4, fixed_abs, tag = 'smem constant byte address 0x4 - core index']
  #allocation1 [shape = 'u32[144,128]{1,0:T(1,128)}', space=vmem, size = 0x12000, scoped, tag = 'internal scratch']
  %s0 = inlined_call_operand.vmem [shape: f32[256,16], index: 0, kind: input, shape index: {}]
  %s1 = inlined_call_operand.vmem [shape: f32[16,192], index: 1, kind: input, shape index: {}]
  %s2 = inlined_call_operand.vmem [shape: f32[1,192], index: 2, kind: input, shape index: {}]
  %s3 = inlined_call_operand.vmem [shape: f32[5,32,32], index: 3, kind: input, shape index: {}]
  %s4 = inlined_call_operand.vmem [shape: f32[256,32], index: 4, kind: output, shape index: {}]
  %s5 = sld [smem:[#allocation0]]
  $region49: #{tpu_custom_call.1} parent=0
    _
  %s7 = ssub.s32 1, %s5
  %s8 = scalar_select 0, %s7, %s5
  loop: start=0, step=1, limit=6
  $region2: #{tpu_custom_call.1} parent=0 // loop_pre_header
    _
  $region3: #{tpu_custom_call.1} parent=0 // loop_header
    %s10 = sphi 0, %s14
    %p11 = scmp.ge.s32.totalorder %s10, 6
    %s20 = sphi 0, %s22
    %s23 = sphi 0, %s20
    %s24 = sphi 0, %s23
    %s40 = sphi 0, %s24
    %s44 = sphi 0, %s44
    %s46 = sphi 0, %s44
    %s47 = sphi 0, %s46
    %s61 = sphi 0, %s47
    %s65 = sphi 0, %s65
    %s67 = sphi 0, %s65
    %s68 = sphi 0, %s67
    %s82 = sphi 0, %s68
    %s86 = sphi 0, %s86
    %s88 = sphi 0, %s86
    %s89 = sphi 0, %s88
    %s103 = sphi 0, %s89
    %s109 = sphi 0, %s111
    %s112 = sphi 0, %s109
    %s113 = sphi 0, %s112
    %s129 = sphi 0, %s113
  $region4: #{tpu_custom_call.1} parent=0 // loop_header_branch
    %13 = sbr.rel (%p11) target = $region8
  $region5: #{tpu_custom_call.1} parent=0 // loop_body
    %s15 = ssub.s32 %s10, 1
    %s16 = ssub.s32 %s10, 2
    %s17 = sadd.s32 %s10, 1
    %s18 = ssub.s32 %s10, %s17
    %p19 = scmp.eq.s32.totalorder %s18, 0
    %s21 = sadd.s32 %s20, 1
    %s22 = scalar_select %p19, %s20, %s21
    %p25 = pneg %p19
    %p26 = scmp.eq.s32.totalorder %s10, 3
    %p27 = por %p25, %p26
    %p28 = scmp.ne.s32.totalorder %s20, %s23
    %p29 = scmp.eq.s32.totalorder %s10, 0
    %p30 = por %p28, %p29
    %p31 = scmp.ne.s32.totalorder %s20, %s23
    %p32 = scmp.eq.s32.totalorder %s15, 3
    %p33 = por %p31, %p32
    %p34 = scmp.ne.s32.totalorder %s23, %s24
    %p35 = scmp.eq.s32.totalorder %s15, 0
    %p36 = por %p34, %p35
    %p37 = scmp.ne.s32.totalorder %s23, %s24
    %p38 = scmp.eq.s32.totalorder %s16, 3
    %p39 = por %p37, %p38
    %p41 = scmp.ne.s32.totalorder %s24, %s40
    %p42 = scmp.eq.s32.totalorder %s16, 0
    %p43 = por %p41, %p42
    %s45 = sadd.s32 %s44, 1
    %p48 = scmp.eq.s32.totalorder %s10, 3
    %p49 = scmp.ne.s32.totalorder %s44, %s46
    %p50 = scmp.eq.s32.totalorder %s10, 0
    %p51 = por %p49, %p50
    %p52 = scmp.ne.s32.totalorder %s44, %s46
    %p53 = scmp.eq.s32.totalorder %s15, 3
    %p54 = por %p52, %p53
    %p55 = scmp.ne.s32.totalorder %s46, %s47
    %p56 = scmp.eq.s32.totalorder %s15, 0
    %p57 = por %p55, %p56
    %p58 = scmp.ne.s32.totalorder %s46, %s47
    %p59 = scmp.eq.s32.totalorder %s16, 3
    %p60 = por %p58, %p59
    %p62 = scmp.ne.s32.totalorder %s47, %s61
    %p63 = scmp.eq.s32.totalorder %s16, 0
    %p64 = por %p62, %p63
    %s66 = sadd.s32 %s65, 1
    %p69 = scmp.eq.s32.totalorder %s10, 3
    %p70 = scmp.ne.s32.totalorder %s65, %s67
    %p71 = scmp.eq.s32.totalorder %s10, 0
    %p72 = por %p70, %p71
    %p73 = scmp.ne.s32.totalorder %s65, %s67
    %p74 = scmp.eq.s32.totalorder %s15, 3
    %p75 = por %p73, %p74
    %p76 = scmp.ne.s32.totalorder %s67, %s68
    %p77 = scmp.eq.s32.totalorder %s15, 0
    %p78 = por %p76, %p77
    %p79 = scmp.ne.s32.totalorder %s67, %s68
    %p80 = scmp.eq.s32.totalorder %s16, 3
    %p81 = por %p79, %p80
    %p83 = scmp.ne.s32.totalorder %s68, %s82
    %p84 = scmp.eq.s32.totalorder %s16, 0
    %p85 = por %p83, %p84
    %s87 = sadd.s32 %s86, 1
    %p90 = scmp.eq.s32.totalorder %s10, 3
    %p91 = scmp.ne.s32.totalorder %s86, %s88
    %p92 = scmp.eq.s32.totalorder %s10, 0
    %p93 = por %p91, %p92
    %p94 = scmp.ne.s32.totalorder %s86, %s88
    %p95 = scmp.eq.s32.totalorder %s15, 3
    %p96 = por %p94, %p95
    %p97 = scmp.ne.s32.totalorder %s88, %s89
    %p98 = scmp.eq.s32.totalorder %s15, 0
    %p99 = por %p97, %p98
    %p100 = scmp.ne.s32.totalorder %s88, %s89
    %p101 = scmp.eq.s32.totalorder %s16, 3
    %p102 = por %p100, %p101
    %p104 = scmp.ne.s32.totalorder %s89, %s103
    %p105 = scmp.eq.s32.totalorder %s16, 0
    %p106 = por %p104, %p105
    %s107 = ssub.s32 %s10, %s17
    %p108 = scmp.eq.s32.totalorder %s107, 0
    %s110 = sadd.s32 %s109, 1
    %s111 = scalar_select %p108, %s109, %s110
    %p114 = pneg %p108
    %p115 = scmp.eq.s32.totalorder %s10, 3
    %p116 = por %p114, %p115
    %p117 = scmp.ne.s32.totalorder %s109, %s112
    %p118 = scmp.eq.s32.totalorder %s10, 0
    %p119 = por %p117, %p118
    %p120 = scmp.ne.s32.totalorder %s109, %s112
    %p121 = scmp.eq.s32.totalorder %s15, 3
    %p122 = por %p120, %p121
    %p123 = scmp.ne.s32.totalorder %s112, %s113
    %p124 = scmp.eq.s32.totalorder %s15, 0
    %p125 = por %p123, %p124
    %p126 = scmp.ne.s32.totalorder %s112, %s113
    %p127 = scmp.eq.s32.totalorder %s16, 3
    %p128 = por %p126, %p127
    %p130 = scmp.ne.s32.totalorder %s113, %s129
    %p131 = scmp.eq.s32.totalorder %s16, 0
    %p132 = por %p130, %p131
    %p133 = scmp.le.s32.totalorder 1, %s10
    %p134 = scmp.lt.s32.totalorder %s10, 5
    %p135 = pnand %p133, %p134
    %p136 = pneg %p135
    // Predicated region
    $region9: #{tpu_custom_call.1} parent=5 // pred_check
      _
    $region10: #{tpu_custom_call.1} parent=5 // pred_check_branch
      %138 = sbr.rel (%p135) target = $region12
    $region11: #{tpu_custom_call.1} parent=5 // pred_region
      %s139 = ssub.s32 %s10, 1
      // Predicated region
      $region13: #{tpu_custom_call.1} parent=11 // pred_check
        %p140 = pneg %p57
      $region14: #{tpu_custom_call.1} parent=11 // pred_check_branch
        %142 = sbr.rel (%p140) target = $region16
      $region15: #{tpu_custom_call.1} parent=11 // pred_region
        _
      $region16: #{tpu_custom_call.1} parent=11 // pred_fallthru
        _
      // Predicated region
      $region17: #{tpu_custom_call.1} parent=11 // pred_check
        %p143 = pneg %p78
      $region18: #{tpu_custom_call.1} parent=11 // pred_check_branch
        %145 = sbr.rel (%p143) target = $region20
      $region19: #{tpu_custom_call.1} parent=11 // pred_region
        _
      $region20: #{tpu_custom_call.1} parent=11 // pred_fallthru
        _
      // Predicated region
      $region21: #{tpu_custom_call.1} parent=11 // pred_check
        %p146 = pneg %p99
      $region22: #{tpu_custom_call.1} parent=11 // pred_check_branch
        %148 = sbr.rel (%p146) target = $region24
      $region23: #{tpu_custom_call.1} parent=11 // pred_region
        _
      $region24: #{tpu_custom_call.1} parent=11 // pred_fallthru
        _
    $region12: #{tpu_custom_call.1} parent=5 // pred_fallthru
      _
    %p149 = scmp.lt.s32.totalorder %s10, 4
    // Predicated region
    $region25: #{tpu_custom_call.1} parent=5 // pred_check
      %p150 = pneg %p149
    $region26: #{tpu_custom_call.1} parent=5 // pred_check_branch
      %152 = sbr.rel (%p150) target = $region28
    $region27: #{tpu_custom_call.1} parent=5 // pred_region
      // Predicated region
      $region29: #{tpu_custom_call.1} parent=27 // pred_check
        %p153 = pneg %p30
      $region30: #{tpu_custom_call.1} parent=27 // pred_check_branch
        %155 = sbr.rel (%p153) target = $region32
      $region31: #{tpu_custom_call.1} parent=27 // pred_region
        %s156 = smul.u32 8, %s10
        %p157 = scmp.lt.s32.totalorder %s156, 31
        %s158 = scalar_select %p157, %s156, 31
        %s159 = smul.addr %s158, 8
        %s160 = scalar_lea.vmem %s0, %s159
        %s161 = smul.u32 8, %s10
      $region32: #{tpu_custom_call.1} parent=27 // pred_fallthru
        _
    $region28: #{tpu_custom_call.1} parent=5 // pred_fallthru
      _
    %p162 = scmp.le.s32.totalorder 1, %s10
    %p163 = scmp.lt.s32.totalorder %s10, 5
    %p164 = pnand %p162, %p163
    %p165 = pneg %p164
    // Predicated region
    $region33: #{tpu_custom_call.1} parent=5 // pred_check
      _
    $region34: #{tpu_custom_call.1} parent=5 // pred_check_branch
      %167 = sbr.rel (%p164) target = $region36
    $region35: #{tpu_custom_call.1} parent=5 // pred_region
      %s168 = ssub.s32 %s10, 1
      %s169 = smul.u32 8, %s15
      %p170 = scmp.lt.s32.totalorder %s169, 31
      %s171 = scalar_select %p170, %s169, 31
      %s172 = smul.addr %s171, 8
      %s173 = scalar_lea.vmem %s0, %s172
      %p174 = pneg %p36
      %p175 = pneg %p33
      %p176 = pneg %p57
      %p177 = pneg %p54
      %p178 = pneg %p78
      %p179 = pneg %p75
      %p180 = pneg %p99
      %p181 = pneg %p96
      %p182 = pneg %p125
      %p183 = pneg %p122
      %s184 = smul.u32 8, %s15
      %p185 = scmp.lt.s32.totalorder %s184, 31
      %s186 = scalar_select %p185, %s184, 31
      %s187 = smul.addr %s186, 8
      %s188 = scalar_lea.vmem %s4, %s187
      %s189 = smul.u32 8, %s15
      %p190 = scmp.lt.s32.totalorder %s189, 31
      %s191 = scalar_select %p190, %s189, 31
      %s192 = smul.addr %s191, 8
      %s193 = scalar_lea.vmem %s0, %s192
      %s194 = smul.u32 8, %s15
      %s195 = smul.u32 8, %s15
      %p196 = scmp.lt.s32.totalorder %s195, 31
      %s197 = scalar_select %p196, %s195, 31
      %s198 = smul.addr %s197, 8
      %s199 = scalar_lea.vmem %s4, %s198
      %s200 = smul.u32 8, %s15
      %v201 = vld [vmem:[%s193] sm:$0xff]
      %v202 = vld [vmem:[%s193 + $0x8] sm:$0xff]
      %v203 = vld [vmem:[%s193 + $0x10] sm:$0xff]
      %v204 = vld [vmem:[%s193 + $0x18] sm:$0xff]
      %v205 = vld [vmem:[%s193 + $0x20] sm:$0xff]
      %v206 = vld [vmem:[%s193 + $0x28] sm:$0xff]
      %v207 = vld [vmem:[%s193 + $0x30] sm:$0xff]
      %v208 = vld [vmem:[%s193 + $0x38] sm:$0xff]
      %v209 = vld [vmem:[%s1] sm:$0xff]
      %v210 = vld [vmem:[%s1 + $0x8] sm:$0xff]
      %v211 = vld [vmem:[%s1 + $0x10] sm:$0xff]
      %v212 = vld [vmem:[%s1 + $0x18] sm:$0xff]
      %v213 = vld [vmem:[%s2] sm:$0x3]
      %v215 = vlaneseq
      %v216 = vshrl.u32 %v215, 7
      %v217 = vsub.s32 0, %v216
      %v218 = vrot.slane %v213, %v217
      %v219 = vlaneseq
      %v220 = vshrl.u32 %v219, 7
      %v221 = vsub.s32 1, %v220
      %v222 = vrot.slane %v213, %v221
      %vm225 = vcmask 130048
      %v227 = vsel %vm225, %v201, 0
      %v230 = vsel %vm225, %v202, 0
      %v233 = vsel %vm225, %v203, 0
      %v236 = vsel %vm225, %v204, 0
      %v239 = vsel %vm225, %v205, 0
      %v242 = vsel %vm225, %v206, 0
      %v245 = vsel %vm225, %v207, 0
      %v248 = vsel %vm225, %v208, 0
      %250 = vmatprep.subr.mxu0 0.0
      %251 = vmatpush1.msra.mxu0 0.0
      %252 = vmatprep.subr.mxu0 0.0
      %253 = vmatpush1.msra.mxu0 0.0
      %254 = vmatprep.subr.mxu0 0.0
      %255 = vmatpush1.msra.mxu0 0.0
      %256 = vmatprep.subr.mxu0 0.0
      %257 = vmatpush1.msra.mxu0 0.0
      %258 = vmatprep.subr.mxu0 0.0
      %259 = vmatpush1.msra.mxu0 0.0
      %260 = vmatprep.subr.mxu0 0.0
      %261 = vmatpush1.msra.mxu0 0.0
      %262 = vmatprep.subr.mxu0 0.0
      %263 = vmatpush1.msra.mxu0 0.0
      %264 = vmatprep.subr.mxu0 0.0
      %265 = vmatpush1.msra.mxu0 0.0
      %266 = vmatprep.subr.mxu0 0.0
      %267 = vmatpush1.msra.mxu0 0.0
      %268 = vmatprep.subr.mxu0 0.0
      %269 = vmatpush1.msra.mxu0 0.0
      %270 = vmatprep.subr.mxu0 0.0
      %271 = vmatpush1.msra.mxu0 0.0
      %272 = vmatprep.subr.mxu0 0.0
      %273 = vmatpush1.msra.mxu0 0.0
      %274 = vmatprep.subr.mxu0 0.0
      %275 = vmatpush1.msra.mxu0 0.0
      %276 = vmatprep.subr.mxu0 0.0
      %277 = vmatpush1.msra.mxu0 0.0
      %278 = vmatprep.subr.mxu0 %v212
      %279 = vmatpush1.msra.mxu0 %v211
      %280 = vmatprep.subr.mxu0 %v210
      %281 = vmatpush1.msra.mxu0 %v209
      %282 = vmatprep.subr.mxu0 0.0
      %283 = vmatpush2.msra.mxu0 0.0
      %284 = vmatprep.subr.mxu0 0.0
      %285 = vmatpush2.msra.mxu0 0.0
      %286 = vmatprep.subr.mxu0 0.0
      %287 = vmatpush2.msra.mxu0 0.0
      %288 = vmatprep.subr.mxu0 0.0
      %289 = vmatpush2.msra.mxu0 0.0
      %290 = vmatprep.subr.mxu0 0.0
      %291 = vmatpush2.msra.mxu0 0.0
      %292 = vmatprep.subr.mxu0 0.0
      %293 = vmatpush2.msra.mxu0 0.0
      %294 = vmatprep.subr.mxu0 0.0
      %295 = vmatpush2.msra.mxu0 0.0
      %296 = vmatprep.subr.mxu0 0.0
      %297 = vmatpush2.msra.mxu0 0.0
      %298 = vmatprep.subr.mxu0 0.0
      %299 = vmatpush2.msra.mxu0 0.0
      %300 = vmatprep.subr.mxu0 0.0
      %301 = vmatpush2.msra.mxu0 0.0
      %302 = vmatprep.subr.mxu0 0.0
      %303 = vmatpush2.msra.mxu0 0.0
      %304 = vmatprep.subr.mxu0 0.0
      %305 = vmatpush2.msra.mxu0 0.0
      %306 = vmatprep.subr.mxu0 0.0
      %307 = vmatpush2.msra.mxu0 0.0
      %308 = vmatprep.subr.mxu0 0.0
      %309 = vmatpush2.msra.mxu0 0.0
      %310 = vmatprep.subr.mxu0 0.0
      %311 = vmatpush2.msra.mxu0 0.0
      %312 = vmatprep.subr.mxu0 0.0
      %313 = vmatpush2.msra.mxu0 0.0
      %314 = vmatprep.mubr.f32.mxu0 0.0
      %315 = vmatmul.mubr.f32.gmra.mxu0 %v227
      %v316 = vpop.f32.mrf.mxu0
      %v317 = vadd.f32 %v218, %v316
      %v318 = vpop.f32.mrf.mxu0
      %v319 = vadd.f32 %v222, %v318
      %320 = vmatprep.mubr.f32.mxu0 0.0
      %321 = vmatmul.mubr.f32.gmra.mxu0 %v230
      %v322 = vpop.f32.mrf.mxu0
      %v323 = vadd.f32 %v218, %v322
      %v324 = vpop.f32.mrf.mxu0
      %v325 = vadd.f32 %v222, %v324
      %326 = vmatprep.mubr.f32.mxu0 0.0
      %327 = vmatmul.mubr.f32.gmra.mxu0 %v233
      %v328 = vpop.f32.mrf.mxu0
      %v329 = vadd.f32 %v218, %v328
      %v330 = vpop.f32.mrf.mxu0
      %v331 = vadd.f32 %v222, %v330
      %332 = vmatprep.mubr.f32.mxu0 0.0
      %333 = vmatmul.mubr.f32.gmra.mxu0 %v236
      %v334 = vpop.f32.mrf.mxu0
      %v335 = vadd.f32 %v218, %v334
      %v336 = vpop.f32.mrf.mxu0
      %v337 = vadd.f32 %v222, %v336
      %338 = vmatprep.mubr.f32.mxu0 0.0
      %339 = vmatmul.mubr.f32.gmra.mxu0 %v239
      %v340 = vpop.f32.mrf.mxu0
      %v341 = vadd.f32 %v218, %v340
      %v342 = vpop.f32.mrf.mxu0
      %v343 = vadd.f32 %v222, %v342
      %344 = vmatprep.mubr.f32.mxu0 0.0
      %345 = vmatmul.mubr.f32.gmra.mxu0 %v242
      %v346 = vpop.f32.mrf.mxu0
      %v347 = vadd.f32 %v218, %v346
      %v348 = vpop.f32.mrf.mxu0
      %v349 = vadd.f32 %v222, %v348
      %350 = vmatprep.mubr.f32.mxu0 0.0
      %351 = vmatmul.mubr.f32.gmra.mxu0 %v245
      %v352 = vpop.f32.mrf.mxu0
      %v353 = vadd.f32 %v218, %v352
      %v354 = vpop.f32.mrf.mxu0
      %v355 = vadd.f32 %v222, %v354
      %356 = vmatprep.mubr.f32.mxu0 0.0
      %357 = vmatmul.mubr.f32.gmra.mxu0 %v248
      %v358 = vpop.f32.mrf.mxu0
      %v359 = vadd.f32 %v218, %v358
      %v360 = vpop.f32.mrf.mxu0
      %v361 = vadd.f32 %v222, %v360
      %362 = vdwg.mxu0
      %v363 = vmax.f32 %v317, 0.0
      %v364 = vmax.f32 %v323, 0.0
      %v365 = vmax.f32 %v329, 0.0
      %v366 = vmax.f32 %v335, 0.0
      %v367 = vmax.f32 %v341, 0.0
      %v368 = vmax.f32 %v347, 0.0
      %v369 = vmax.f32 %v353, 0.0
      %v370 = vmax.f32 %v359, 0.0
      %v371 = vld [vmem:[%s3] sm:$0xff]
      %v372 = vld [vmem:[%s3 + $0x8] sm:$0xff]
      %v373 = vld [vmem:[%s3 + $0x10] sm:$0xff]
      %v374 = vld [vmem:[%s3 + $0x18] sm:$0xff]
      %vm375 = vcmask 261120
      %v377 = vsel %vm375, %v363, 0
      %v380 = vsel %vm375, %v364, 0
      %v383 = vsel %vm375, %v365, 0
      %v386 = vsel %vm375, %v366, 0
      %v389 = vsel %vm375, %v367, 0
      %v392 = vsel %vm375, %v368, 0
      %v395 = vsel %vm375, %v369, 0
      %v398 = vsel %vm375, %v370, 0
      %400 = vmatprep.subr.mxu0 0.0
      %401 = vmatpush1.msra.mxu0 0.0
      %402 = vmatprep.subr.mxu0 0.0
      %403 = vmatpush1.msra.mxu0 0.0
      %404 = vmatprep.subr.mxu0 0.0
      %405 = vmatpush1.msra.mxu0 0.0
      %406 = vmatprep.subr.mxu0 0.0
      %407 = vmatpush1.msra.mxu0 0.0
      %408 = vmatprep.subr.mxu0 0.0
      %409 = vmatpush1.msra.mxu0 0.0
      %410 = vmatprep.subr.mxu0 0.0
      %411 = vmatpush1.msra.mxu0 0.0
      %412 = vmatprep.subr.mxu0 0.0
      %413 = vmatpush1.msra.mxu0 0.0
      %414 = vmatprep.subr.mxu0 0.0
      %415 = vmatpush1.msra.mxu0 0.0
      %416 = vmatprep.subr.mxu0 0.0
      %417 = vmatpush1.msra.mxu0 0.0
      %418 = vmatprep.subr.mxu0 0.0
      %419 = vmatpush1.msra.mxu0 0.0
      %420 = vmatprep.subr.mxu0 0.0
      %421 = vmatpush1.msra.mxu0 0.0
      %422 = vmatprep.subr.mxu0 0.0
      %423 = vmatpush1.msra.mxu0 0.0
      %424 = vmatprep.subr.mxu0 0.0
      %425 = vmatpush1.msra.mxu0 %v374
      %426 = vmatprep.subr.mxu0 0.0
      %427 = vmatpush1.msra.mxu0 %v373
      %428 = vmatprep.subr.mxu0 0.0
      %429 = vmatpush1.msra.mxu0 %v372
      %430 = vmatprep.subr.mxu0 0.0
      %431 = vmatpush1.msra.mxu0 %v371
      %432 = vmatprep.subr.mxu0 0.0
      %433 = vmatpush2.msra.mxu0 0.0
      %434 = vmatprep.subr.mxu0 0.0
      %435 = vmatpush2.msra.mxu0 0.0
      %436 = vmatprep.subr.mxu0 0.0
      %437 = vmatpush2.msra.mxu0 0.0
      %438 = vmatprep.subr.mxu0 0.0
      %439 = vmatpush2.msra.mxu0 0.0
      %440 = vmatprep.subr.mxu0 0.0
      %441 = vmatpush2.msra.mxu0 0.0
      %442 = vmatprep.subr.mxu0 0.0
      %443 = vmatpush2.msra.mxu0 0.0
      %444 = vmatprep.subr.mxu0 0.0
      %445 = vmatpush2.msra.mxu0 0.0
      %446 = vmatprep.subr.mxu0 0.0
      %447 = vmatpush2.msra.mxu0 0.0
      %448 = vmatprep.subr.mxu0 0.0
      %449 = vmatpush2.msra.mxu0 0.0
      %450 = vmatprep.subr.mxu0 0.0
      %451 = vmatpush2.msra.mxu0 0.0
      %452 = vmatprep.subr.mxu0 0.0
      %453 = vmatpush2.msra.mxu0 0.0
      %454 = vmatprep.subr.mxu0 0.0
      %455 = vmatpush2.msra.mxu0 0.0
      %456 = vmatprep.subr.mxu0 0.0
      %457 = vmatpush2.msra.mxu0 0.0
      %458 = vmatprep.subr.mxu0 0.0
      %459 = vmatpush2.msra.mxu0 0.0
      %460 = vmatprep.subr.mxu0 0.0
      %461 = vmatpush2.msra.mxu0 0.0
      %462 = vmatprep.subr.mxu0 0.0
      %463 = vmatpush2.msra.mxu0 0.0
      %464 = vmatprep.mubr.f32.mxu0 0.0
      %465 = vmatmul.mubr.f32.gmra.mxu0 %v377
      %v466 = vpop.f32.mrf.mxu0
      %v467 = vadd.f32 0.0, %v466
      %v468 = vpop.f32.mrf.mxu0
      %469 = vmatprep.mubr.f32.mxu0 0.0
      %470 = vmatmul.mubr.f32.gmra.mxu0 %v380
      %v471 = vpop.f32.mrf.mxu0
      %v472 = vadd.f32 0.0, %v471
      %v473 = vpop.f32.mrf.mxu0
      %474 = vmatprep.mubr.f32.mxu0 0.0
      %475 = vmatmul.mubr.f32.gmra.mxu0 %v383
      %v476 = vpop.f32.mrf.mxu0
      %v477 = vadd.f32 0.0, %v476
      %v478 = vpop.f32.mrf.mxu0
      %479 = vmatprep.mubr.f32.mxu0 0.0
      %480 = vmatmul.mubr.f32.gmra.mxu0 %v386
      %v481 = vpop.f32.mrf.mxu0
      %v482 = vadd.f32 0.0, %v481
      %v483 = vpop.f32.mrf.mxu0
      %484 = vmatprep.mubr.f32.mxu0 0.0
      %485 = vmatmul.mubr.f32.gmra.mxu0 %v389
      %v486 = vpop.f32.mrf.mxu0
      %v487 = vadd.f32 0.0, %v486
      %v488 = vpop.f32.mrf.mxu0
      %489 = vmatprep.mubr.f32.mxu0 0.0
      %490 = vmatmul.mubr.f32.gmra.mxu0 %v392
      %v491 = vpop.f32.mrf.mxu0
      %v492 = vadd.f32 0.0, %v491
      %v493 = vpop.f32.mrf.mxu0
      %494 = vmatprep.mubr.f32.mxu0 0.0
      %495 = vmatmul.mubr.f32.gmra.mxu0 %v395
      %v496 = vpop.f32.mrf.mxu0
      %v497 = vadd.f32 0.0, %v496
      %v498 = vpop.f32.mrf.mxu0
      %499 = vmatprep.mubr.f32.mxu0 0.0
      %500 = vmatmul.mubr.f32.gmra.mxu0 %v398
      %v501 = vpop.f32.mrf.mxu0
      %v502 = vadd.f32 0.0, %v501
      %v503 = vpop.f32.mrf.mxu0
      %504 = vdwg.mxu0
      %513 = vrot.lane.b32.xlu0 %v467, 32
      %v514 = vpop.permute.xlu0 %513
      %515 = vrot.lane.b32.xlu0 %v472, 32
      %v516 = vpop.permute.xlu0 %515
      %517 = vrot.lane.b32.xlu0 %v477, 32
      %v518 = vpop.permute.xlu0 %517
      %519 = vrot.lane.b32.xlu0 %v482, 32
      %v520 = vpop.permute.xlu0 %519
      %521 = vrot.lane.b32.xlu0 %v487, 32
      %v522 = vpop.permute.xlu0 %521
      %523 = vrot.lane.b32.xlu0 %v492, 32
      %v524 = vpop.permute.xlu0 %523
      %525 = vrot.lane.b32.xlu0 %v497, 32
      %v526 = vpop.permute.xlu0 %525
      %527 = vrot.lane.b32.xlu0 %v502, 32
      %v528 = vpop.permute.xlu0 %527
      %v537 = vadd.f32 %v317, %v514
      %v538 = vadd.f32 %v323, %v516
      %v539 = vadd.f32 %v329, %v518
      %v540 = vadd.f32 %v335, %v520
      %v541 = vadd.f32 %v341, %v522
      %v542 = vadd.f32 %v347, %v524
      %v543 = vadd.f32 %v353, %v526
      %v544 = vadd.f32 %v359, %v528
      %v545 = vmax.f32 %v537, 0.0
      %v546 = vmax.f32 %v538, 0.0
      %v547 = vmax.f32 %v539, 0.0
      %v548 = vmax.f32 %v540, 0.0
      %v549 = vmax.f32 %v541, 0.0
      %v550 = vmax.f32 %v542, 0.0
      %v551 = vmax.f32 %v543, 0.0
      %v552 = vmax.f32 %v544, 0.0
      %s553 = scalar_lea.vmem %s3, 32
      %v554 = vld [vmem:[%s553] sm:$0xff]
      %v555 = vld [vmem:[%s553 + $0x8] sm:$0xff]
      %v556 = vld [vmem:[%s553 + $0x10] sm:$0xff]
      %v557 = vld [vmem:[%s553 + $0x18] sm:$0xff]
      %566 = vrot.lane.b32.xlu0 %v545, 96
      %v567 = vpop.permute.xlu0 %566
      %568 = vrot.lane.b32.xlu0 %v546, 96
      %v569 = vpop.permute.xlu0 %568
      %570 = vrot.lane.b32.xlu0 %v547, 96
      %v571 = vpop.permute.xlu0 %570
      %572 = vrot.lane.b32.xlu0 %v548, 96
      %v573 = vpop.permute.xlu0 %572
      %574 = vrot.lane.b32.xlu0 %v549, 96
      %v575 = vpop.permute.xlu0 %574
      %576 = vrot.lane.b32.xlu0 %v550, 96
      %v577 = vpop.permute.xlu0 %576
      %578 = vrot.lane.b32.xlu0 %v551, 96
      %v579 = vpop.permute.xlu0 %578
      %580 = vrot.lane.b32.xlu0 %v552, 96
      %v581 = vpop.permute.xlu0 %580
      %v582 = vsel %vm375, %v567, 0
      %v584 = vsel %vm375, %v569, 0
      %v586 = vsel %vm375, %v571, 0
      %v588 = vsel %vm375, %v573, 0
      %v590 = vsel %vm375, %v575, 0
      %v592 = vsel %vm375, %v577, 0
      %v594 = vsel %vm375, %v579, 0
      %v596 = vsel %vm375, %v581, 0
      %598 = vmatprep.subr.mxu0 0.0
      %599 = vmatpush1.msra.mxu0 0.0
      %600 = vmatprep.subr.mxu0 0.0
      %601 = vmatpush1.msra.mxu0 0.0
      %602 = vmatprep.subr.mxu0 0.0
      %603 = vmatpush1.msra.mxu0 0.0
      %604 = vmatprep.subr.mxu0 0.0
      %605 = vmatpush1.msra.mxu0 0.0
      %606 = vmatprep.subr.mxu0 0.0
      %607 = vmatpush1.msra.mxu0 0.0
      %608 = vmatprep.subr.mxu0 0.0
      %609 = vmatpush1.msra.mxu0 0.0
      %610 = vmatprep.subr.mxu0 0.0
      %611 = vmatpush1.msra.mxu0 0.0
      %612 = vmatprep.subr.mxu0 0.0
      %613 = vmatpush1.msra.mxu0 0.0
      %614 = vmatprep.subr.mxu0 0.0
      %615 = vmatpush1.msra.mxu0 0.0
      %616 = vmatprep.subr.mxu0 0.0
      %617 = vmatpush1.msra.mxu0 0.0
      %618 = vmatprep.subr.mxu0 0.0
      %619 = vmatpush1.msra.mxu0 0.0
      %620 = vmatprep.subr.mxu0 0.0
      %621 = vmatpush1.msra.mxu0 0.0
      %622 = vmatprep.subr.mxu0 0.0
      %623 = vmatpush1.msra.mxu0 %v557
      %624 = vmatprep.subr.mxu0 0.0
      %625 = vmatpush1.msra.mxu0 %v556
      %626 = vmatprep.subr.mxu0 0.0
      %627 = vmatpush1.msra.mxu0 %v555
      %628 = vmatprep.subr.mxu0 0.0
      %629 = vmatpush1.msra.mxu0 %v554
      %630 = vmatprep.subr.mxu0 0.0
      %631 = vmatpush2.msra.mxu0 0.0
      %632 = vmatprep.subr.mxu0 0.0
      %633 = vmatpush2.msra.mxu0 0.0
      %634 = vmatprep.subr.mxu0 0.0
      %635 = vmatpush2.msra.mxu0 0.0
      %636 = vmatprep.subr.mxu0 0.0
      %637 = vmatpush2.msra.mxu0 0.0
      %638 = vmatprep.subr.mxu0 0.0
      %639 = vmatpush2.msra.mxu0 0.0
      %640 = vmatprep.subr.mxu0 0.0
      %641 = vmatpush2.msra.mxu0 0.0
      %642 = vmatprep.subr.mxu0 0.0
      %643 = vmatpush2.msra.mxu0 0.0
      %644 = vmatprep.subr.mxu0 0.0
      %645 = vmatpush2.msra.mxu0 0.0
      %646 = vmatprep.subr.mxu0 0.0
      %647 = vmatpush2.msra.mxu0 0.0
      %648 = vmatprep.subr.mxu0 0.0
      %649 = vmatpush2.msra.mxu0 0.0
      %650 = vmatprep.subr.mxu0 0.0
      %651 = vmatpush2.msra.mxu0 0.0
      %652 = vmatprep.subr.mxu0 0.0
      %653 = vmatpush2.msra.mxu0 0.0
      %654 = vmatprep.subr.mxu0 0.0
      %655 = vmatpush2.msra.mxu0 0.0
      %656 = vmatprep.subr.mxu0 0.0
      %657 = vmatpush2.msra.mxu0 0.0
      %658 = vmatprep.subr.mxu0 0.0
      %659 = vmatpush2.msra.mxu0 0.0
      %660 = vmatprep.subr.mxu0 0.0
      %661 = vmatpush2.msra.mxu0 0.0
      %662 = vmatprep.mubr.f32.mxu0 0.0
      %663 = vmatmul.mubr.f32.gmra.mxu0 %v582
      %v664 = vpop.f32.mrf.mxu0
      %v665 = vadd.f32 0.0, %v664
      %v666 = vpop.f32.mrf.mxu0
      %667 = vmatprep.mubr.f32.mxu0 0.0
      %668 = vmatmul.mubr.f32.gmra.mxu0 %v584
      %v669 = vpop.f32.mrf.mxu0
      %v670 = vadd.f32 0.0, %v669
      %v671 = vpop.f32.mrf.mxu0
      %672 = vmatprep.mubr.f32.mxu0 0.0
      %673 = vmatmul.mubr.f32.gmra.mxu0 %v586
      %v674 = vpop.f32.mrf.mxu0
      %v675 = vadd.f32 0.0, %v674
      %v676 = vpop.f32.mrf.mxu0
      %677 = vmatprep.mubr.f32.mxu0 0.0
      %678 = vmatmul.mubr.f32.gmra.mxu0 %v588
      %v679 = vpop.f32.mrf.mxu0
      %v680 = vadd.f32 0.0, %v679
      %v681 = vpop.f32.mrf.mxu0
      %682 = vmatprep.mubr.f32.mxu0 0.0
      %683 = vmatmul.mubr.f32.gmra.mxu0 %v590
      %v684 = vpop.f32.mrf.mxu0
      %v685 = vadd.f32 0.0, %v684
      %v686 = vpop.f32.mrf.mxu0
      %687 = vmatprep.mubr.f32.mxu0 0.0
      %688 = vmatmul.mubr.f32.gmra.mxu0 %v592
      %v689 = vpop.f32.mrf.mxu0
      %v690 = vadd.f32 0.0, %v689
      %v691 = vpop.f32.mrf.mxu0
      %692 = vmatprep.mubr.f32.mxu0 0.0
      %693 = vmatmul.mubr.f32.gmra.mxu0 %v594
      %v694 = vpop.f32.mrf.mxu0
      %v695 = vadd.f32 0.0, %v694
      %v696 = vpop.f32.mrf.mxu0
      %697 = vmatprep.mubr.f32.mxu0 0.0
      %698 = vmatmul.mubr.f32.gmra.mxu0 %v596
      %v699 = vpop.f32.mrf.mxu0
      %v700 = vadd.f32 0.0, %v699
      %v701 = vpop.f32.mrf.mxu0
      %702 = vdwg.mxu0
      %711 = vrot.lane.b32.xlu0 %v665, 64
      %v712 = vpop.permute.xlu0 %711
      %713 = vrot.lane.b32.xlu0 %v670, 64
      %v714 = vpop.permute.xlu0 %713
      %715 = vrot.lane.b32.xlu0 %v675, 64
      %v716 = vpop.permute.xlu0 %715
      %717 = vrot.lane.b32.xlu0 %v680, 64
      %v718 = vpop.permute.xlu0 %717
      %719 = vrot.lane.b32.xlu0 %v685, 64
      %v720 = vpop.permute.xlu0 %719
      %721 = vrot.lane.b32.xlu0 %v690, 64
      %v722 = vpop.permute.xlu0 %721
      %723 = vrot.lane.b32.xlu0 %v695, 64
      %v724 = vpop.permute.xlu0 %723
      %725 = vrot.lane.b32.xlu0 %v700, 64
      %v726 = vpop.permute.xlu0 %725
      %v735 = vadd.f32 %v317, %v712
      %v736 = vadd.f32 %v323, %v714
      %v737 = vadd.f32 %v329, %v716
      %v738 = vadd.f32 %v335, %v718
      %v739 = vadd.f32 %v341, %v720
      %v740 = vadd.f32 %v347, %v722
      %v741 = vadd.f32 %v353, %v724
      %v742 = vadd.f32 %v359, %v726
      %v743 = vmax.f32 %v735, 0.0
      %v744 = vmax.f32 %v736, 0.0
      %v745 = vmax.f32 %v737, 0.0
      %v746 = vmax.f32 %v738, 0.0
      %v747 = vmax.f32 %v739, 0.0
      %v748 = vmax.f32 %v740, 0.0
      %v749 = vmax.f32 %v741, 0.0
      %v750 = vmax.f32 %v742, 0.0
      %s751 = scalar_lea.vmem %s3, 64
      %v752 = vld [vmem:[%s751] sm:$0xff]
      %v753 = vld [vmem:[%s751 + $0x8] sm:$0xff]
      %v754 = vld [vmem:[%s751 + $0x10] sm:$0xff]
      %v755 = vld [vmem:[%s751 + $0x18] sm:$0xff]
      %764 = vrot.lane.b32.xlu0 %v743, 64
      %v765 = vpop.permute.xlu0 %764
      %766 = vrot.lane.b32.xlu0 %v744, 64
      %v767 = vpop.permute.xlu0 %766
      %768 = vrot.lane.b32.xlu0 %v745, 64
      %v769 = vpop.permute.xlu0 %768
      %770 = vrot.lane.b32.xlu0 %v746, 64
      %v771 = vpop.permute.xlu0 %770
      %772 = vrot.lane.b32.xlu0 %v747, 64
      %v773 = vpop.permute.xlu0 %772
      %774 = vrot.lane.b32.xlu0 %v748, 64
      %v775 = vpop.permute.xlu0 %774
      %776 = vrot.lane.b32.xlu0 %v749, 64
      %v777 = vpop.permute.xlu0 %776
      %778 = vrot.lane.b32.xlu0 %v750, 64
      %v779 = vpop.permute.xlu0 %778
      %v780 = vsel %vm375, %v765, 0
      %v782 = vsel %vm375, %v767, 0
      %v784 = vsel %vm375, %v769, 0
      %v786 = vsel %vm375, %v771, 0
      %v788 = vsel %vm375, %v773, 0
      %v790 = vsel %vm375, %v775, 0
      %v792 = vsel %vm375, %v777, 0
      %v794 = vsel %vm375, %v779, 0
      %796 = vmatprep.subr.mxu0 0.0
      %797 = vmatpush1.msra.mxu0 0.0
      %798 = vmatprep.subr.mxu0 0.0
      %799 = vmatpush1.msra.mxu0 0.0
      %800 = vmatprep.subr.mxu0 0.0
      %801 = vmatpush1.msra.mxu0 0.0
      %802 = vmatprep.subr.mxu0 0.0
      %803 = vmatpush1.msra.mxu0 0.0
      %804 = vmatprep.subr.mxu0 0.0
      %805 = vmatpush1.msra.mxu0 0.0
      %806 = vmatprep.subr.mxu0 0.0
      %807 = vmatpush1.msra.mxu0 0.0
      %808 = vmatprep.subr.mxu0 0.0
      %809 = vmatpush1.msra.mxu0 0.0
      %810 = vmatprep.subr.mxu0 0.0
      %811 = vmatpush1.msra.mxu0 0.0
      %812 = vmatprep.subr.mxu0 0.0
      %813 = vmatpush1.msra.mxu0 0.0
      %814 = vmatprep.subr.mxu0 0.0
      %815 = vmatpush1.msra.mxu0 0.0
      %816 = vmatprep.subr.mxu0 0.0
      %817 = vmatpush1.msra.mxu0 0.0
      %818 = vmatprep.subr.mxu0 0.0
      %819 = vmatpush1.msra.mxu0 0.0
      %820 = vmatprep.subr.mxu0 0.0
      %821 = vmatpush1.msra.mxu0 %v755
      %822 = vmatprep.subr.mxu0 0.0
      %823 = vmatpush1.msra.mxu0 %v754
      %824 = vmatprep.subr.mxu0 0.0
      %825 = vmatpush1.msra.mxu0 %v753
      %826 = vmatprep.subr.mxu0 0.0
      %827 = vmatpush1.msra.mxu0 %v752
      %828 = vmatprep.subr.mxu0 0.0
      %829 = vmatpush2.msra.mxu0 0.0
      %830 = vmatprep.subr.mxu0 0.0
      %831 = vmatpush2.msra.mxu0 0.0
      %832 = vmatprep.subr.mxu0 0.0
      %833 = vmatpush2.msra.mxu0 0.0
      %834 = vmatprep.subr.mxu0 0.0
      %835 = vmatpush2.msra.mxu0 0.0
      %836 = vmatprep.subr.mxu0 0.0
      %837 = vmatpush2.msra.mxu0 0.0
      %838 = vmatprep.subr.mxu0 0.0
      %839 = vmatpush2.msra.mxu0 0.0
      %840 = vmatprep.subr.mxu0 0.0
      %841 = vmatpush2.msra.mxu0 0.0
      %842 = vmatprep.subr.mxu0 0.0
      %843 = vmatpush2.msra.mxu0 0.0
      %844 = vmatprep.subr.mxu0 0.0
      %845 = vmatpush2.msra.mxu0 0.0
      %846 = vmatprep.subr.mxu0 0.0
      %847 = vmatpush2.msra.mxu0 0.0
      %848 = vmatprep.subr.mxu0 0.0
      %849 = vmatpush2.msra.mxu0 0.0
      %850 = vmatprep.subr.mxu0 0.0
      %851 = vmatpush2.msra.mxu0 0.0
      %852 = vmatprep.subr.mxu0 0.0
      %853 = vmatpush2.msra.mxu0 0.0
      %854 = vmatprep.subr.mxu0 0.0
      %855 = vmatpush2.msra.mxu0 0.0
      %856 = vmatprep.subr.mxu0 0.0
      %857 = vmatpush2.msra.mxu0 0.0
      %858 = vmatprep.subr.mxu0 0.0
      %859 = vmatpush2.msra.mxu0 0.0
      %860 = vmatprep.mubr.f32.mxu0 0.0
      %861 = vmatmul.mubr.f32.gmra.mxu0 %v780
      %v862 = vpop.f32.mrf.mxu0
      %v863 = vadd.f32 0.0, %v862
      %v864 = vpop.f32.mrf.mxu0
      %865 = vmatprep.mubr.f32.mxu0 0.0
      %866 = vmatmul.mubr.f32.gmra.mxu0 %v782
      %v867 = vpop.f32.mrf.mxu0
      %v868 = vadd.f32 0.0, %v867
      %v869 = vpop.f32.mrf.mxu0
      %870 = vmatprep.mubr.f32.mxu0 0.0
      %871 = vmatmul.mubr.f32.gmra.mxu0 %v784
      %v872 = vpop.f32.mrf.mxu0
      %v873 = vadd.f32 0.0, %v872
      %v874 = vpop.f32.mrf.mxu0
      %875 = vmatprep.mubr.f32.mxu0 0.0
      %876 = vmatmul.mubr.f32.gmra.mxu0 %v786
      %v877 = vpop.f32.mrf.mxu0
      %v878 = vadd.f32 0.0, %v877
      %v879 = vpop.f32.mrf.mxu0
      %880 = vmatprep.mubr.f32.mxu0 0.0
      %881 = vmatmul.mubr.f32.gmra.mxu0 %v788
      %v882 = vpop.f32.mrf.mxu0
      %v883 = vadd.f32 0.0, %v882
      %v884 = vpop.f32.mrf.mxu0
      %885 = vmatprep.mubr.f32.mxu0 0.0
      %886 = vmatmul.mubr.f32.gmra.mxu0 %v790
      %v887 = vpop.f32.mrf.mxu0
      %v888 = vadd.f32 0.0, %v887
      %v889 = vpop.f32.mrf.mxu0
      %890 = vmatprep.mubr.f32.mxu0 0.0
      %891 = vmatmul.mubr.f32.gmra.mxu0 %v792
      %v892 = vpop.f32.mrf.mxu0
      %v893 = vadd.f32 0.0, %v892
      %v894 = vpop.f32.mrf.mxu0
      %895 = vmatprep.mubr.f32.mxu0 0.0
      %896 = vmatmul.mubr.f32.gmra.mxu0 %v794
      %v897 = vpop.f32.mrf.mxu0
      %v898 = vadd.f32 0.0, %v897
      %v899 = vpop.f32.mrf.mxu0
      %900 = vdwg.mxu0
      %909 = vrot.lane.b32.xlu0 %v863, 96
      %v910 = vpop.permute.xlu0 %909
      %911 = vrot.lane.b32.xlu0 %v868, 96
      %v912 = vpop.permute.xlu0 %911
      %913 = vrot.lane.b32.xlu0 %v873, 96
      %v914 = vpop.permute.xlu0 %913
      %915 = vrot.lane.b32.xlu0 %v878, 96
      %v916 = vpop.permute.xlu0 %915
      %917 = vrot.lane.b32.xlu0 %v883, 96
      %v918 = vpop.permute.xlu0 %917
      %919 = vrot.lane.b32.xlu0 %v888, 96
      %v920 = vpop.permute.xlu0 %919
      %921 = vrot.lane.b32.xlu0 %v893, 96
      %v922 = vpop.permute.xlu0 %921
      %923 = vrot.lane.b32.xlu0 %v898, 96
      %v924 = vpop.permute.xlu0 %923
      %v933 = vadd.f32 %v317, %v910
      %v934 = vadd.f32 %v323, %v912
      %v935 = vadd.f32 %v329, %v914
      %v936 = vadd.f32 %v335, %v916
      %v937 = vadd.f32 %v341, %v918
      %v938 = vadd.f32 %v347, %v920
      %v939 = vadd.f32 %v353, %v922
      %v940 = vadd.f32 %v359, %v924
      %v941 = vmax.f32 %v933, 0.0
      %v942 = vmax.f32 %v934, 0.0
      %v943 = vmax.f32 %v935, 0.0
      %v944 = vmax.f32 %v936, 0.0
      %v945 = vmax.f32 %v937, 0.0
      %v946 = vmax.f32 %v938, 0.0
      %v947 = vmax.f32 %v939, 0.0
      %v948 = vmax.f32 %v940, 0.0
      %s949 = scalar_lea.vmem %s3, 96
      %v950 = vld [vmem:[%s949] sm:$0xff]
      %v951 = vld [vmem:[%s949 + $0x8] sm:$0xff]
      %v952 = vld [vmem:[%s949 + $0x10] sm:$0xff]
      %v953 = vld [vmem:[%s949 + $0x18] sm:$0xff]
      %962 = vrot.lane.b32.xlu0 %v941, 32
      %v963 = vpop.permute.xlu0 %962
      %964 = vrot.lane.b32.xlu0 %v942, 32
      %v965 = vpop.permute.xlu0 %964
      %966 = vrot.lane.b32.xlu0 %v943, 32
      %v967 = vpop.permute.xlu0 %966
      %968 = vrot.lane.b32.xlu0 %v944, 32
      %v969 = vpop.permute.xlu0 %968
      %970 = vrot.lane.b32.xlu0 %v945, 32
      %v971 = vpop.permute.xlu0 %970
      %972 = vrot.lane.b32.xlu0 %v946, 32
      %v973 = vpop.permute.xlu0 %972
      %974 = vrot.lane.b32.xlu0 %v947, 32
      %v975 = vpop.permute.xlu0 %974
      %976 = vrot.lane.b32.xlu0 %v948, 32
      %v977 = vpop.permute.xlu0 %976
      %v978 = vsel %vm375, %v963, 0
      %v980 = vsel %vm375, %v965, 0
      %v982 = vsel %vm375, %v967, 0
      %v984 = vsel %vm375, %v969, 0
      %v986 = vsel %vm375, %v971, 0
      %v988 = vsel %vm375, %v973, 0
      %v990 = vsel %vm375, %v975, 0
      %v992 = vsel %vm375, %v977, 0
      %994 = vmatprep.subr.mxu0 0.0
      %995 = vmatpush1.msra.mxu0 0.0
      %996 = vmatprep.subr.mxu0 0.0
      %997 = vmatpush1.msra.mxu0 0.0
      %998 = vmatprep.subr.mxu0 0.0
      %999 = vmatpush1.msra.mxu0 0.0
      %1000 = vmatprep.subr.mxu0 0.0
      %1001 = vmatpush1.msra.mxu0 0.0
      %1002 = vmatprep.subr.mxu0 0.0
      %1003 = vmatpush1.msra.mxu0 0.0
      %1004 = vmatprep.subr.mxu0 0.0
      %1005 = vmatpush1.msra.mxu0 0.0
      %1006 = vmatprep.subr.mxu0 0.0
      %1007 = vmatpush1.msra.mxu0 0.0
      %1008 = vmatprep.subr.mxu0 0.0
      %1009 = vmatpush1.msra.mxu0 0.0
      %1010 = vmatprep.subr.mxu0 0.0
      %1011 = vmatpush1.msra.mxu0 0.0
      %1012 = vmatprep.subr.mxu0 0.0
      %1013 = vmatpush1.msra.mxu0 0.0
      %1014 = vmatprep.subr.mxu0 0.0
      %1015 = vmatpush1.msra.mxu0 0.0
      %1016 = vmatprep.subr.mxu0 0.0
      %1017 = vmatpush1.msra.mxu0 0.0
      %1018 = vmatprep.subr.mxu0 0.0
      %1019 = vmatpush1.msra.mxu0 %v953
      %1020 = vmatprep.subr.mxu0 0.0
      %1021 = vmatpush1.msra.mxu0 %v952
      %1022 = vmatprep.subr.mxu0 0.0
      %1023 = vmatpush1.msra.mxu0 %v951
      %1024 = vmatprep.subr.mxu0 0.0
      %1025 = vmatpush1.msra.mxu0 %v950
      %1026 = vmatprep.subr.mxu0 0.0
      %1027 = vmatpush2.msra.mxu0 0.0
      %1028 = vmatprep.subr.mxu0 0.0
      %1029 = vmatpush2.msra.mxu0 0.0
      %1030 = vmatprep.subr.mxu0 0.0
      %1031 = vmatpush2.msra.mxu0 0.0
      %1032 = vmatprep.subr.mxu0 0.0
      %1033 = vmatpush2.msra.mxu0 0.0
      %1034 = vmatprep.subr.mxu0 0.0
      %1035 = vmatpush2.msra.mxu0 0.0
      %1036 = vmatprep.subr.mxu0 0.0
      %1037 = vmatpush2.msra.mxu0 0.0
      %1038 = vmatprep.subr.mxu0 0.0
      %1039 = vmatpush2.msra.mxu0 0.0
      %1040 = vmatprep.subr.mxu0 0.0
      %1041 = vmatpush2.msra.mxu0 0.0
      %1042 = vmatprep.subr.mxu0 0.0
      %1043 = vmatpush2.msra.mxu0 0.0
      %1044 = vmatprep.subr.mxu0 0.0
      %1045 = vmatpush2.msra.mxu0 0.0
      %1046 = vmatprep.subr.mxu0 0.0
      %1047 = vmatpush2.msra.mxu0 0.0
      %1048 = vmatprep.subr.mxu0 0.0
      %1049 = vmatpush2.msra.mxu0 0.0
      %1050 = vmatprep.subr.mxu0 0.0
      %1051 = vmatpush2.msra.mxu0 0.0
      %1052 = vmatprep.subr.mxu0 0.0
      %1053 = vmatpush2.msra.mxu0 0.0
      %1054 = vmatprep.subr.mxu0 0.0
      %1055 = vmatpush2.msra.mxu0 0.0
      %1056 = vmatprep.subr.mxu0 0.0
      %1057 = vmatpush2.msra.mxu0 0.0
      %1058 = vmatprep.mubr.f32.mxu0 0.0
      %1059 = vmatmul.mubr.f32.gmra.mxu0 %v978
      %v1060 = vpop.f32.mrf.mxu0
      %v1061 = vadd.f32 0.0, %v1060
      %v1062 = vpop.f32.mrf.mxu0
      %1063 = vmatprep.mubr.f32.mxu0 0.0
      %1064 = vmatmul.mubr.f32.gmra.mxu0 %v980
      %v1065 = vpop.f32.mrf.mxu0
      %v1066 = vadd.f32 0.0, %v1065
      %v1067 = vpop.f32.mrf.mxu0
      %1068 = vmatprep.mubr.f32.mxu0 0.0
      %1069 = vmatmul.mubr.f32.gmra.mxu0 %v982
      %v1070 = vpop.f32.mrf.mxu0
      %v1071 = vadd.f32 0.0, %v1070
      %v1072 = vpop.f32.mrf.mxu0
      %1073 = vmatprep.mubr.f32.mxu0 0.0
      %1074 = vmatmul.mubr.f32.gmra.mxu0 %v984
      %v1075 = vpop.f32.mrf.mxu0
      %v1076 = vadd.f32 0.0, %v1075
      %v1077 = vpop.f32.mrf.mxu0
      %1078 = vmatprep.mubr.f32.mxu0 0.0
      %1079 = vmatmul.mubr.f32.gmra.mxu0 %v986
      %v1080 = vpop.f32.mrf.mxu0
      %v1081 = vadd.f32 0.0, %v1080
      %v1082 = vpop.f32.mrf.mxu0
      %1083 = vmatprep.mubr.f32.mxu0 0.0
      %1084 = vmatmul.mubr.f32.gmra.mxu0 %v988
      %v1085 = vpop.f32.mrf.mxu0
      %v1086 = vadd.f32 0.0, %v1085
      %v1087 = vpop.f32.mrf.mxu0
      %1088 = vmatprep.mubr.f32.mxu0 0.0
      %1089 = vmatmul.mubr.f32.gmra.mxu0 %v990
      %v1090 = vpop.f32.mrf.mxu0
      %v1091 = vadd.f32 0.0, %v1090
      %v1092 = vpop.f32.mrf.mxu0
      %1093 = vmatprep.mubr.f32.mxu0 0.0
      %1094 = vmatmul.mubr.f32.gmra.mxu0 %v992
      %v1095 = vpop.f32.mrf.mxu0
      %v1096 = vadd.f32 0.0, %v1095
      %v1097 = vpop.f32.mrf.mxu0
      %1098 = vdwg.mxu0
      %v1099 = vadd.f32 %v319, %v1061
      %v1100 = vadd.f32 %v325, %v1066
      %v1101 = vadd.f32 %v331, %v1071
      %v1102 = vadd.f32 %v337, %v1076
      %v1103 = vadd.f32 %v343, %v1081
      %v1104 = vadd.f32 %v349, %v1086
      %v1105 = vadd.f32 %v355, %v1091
      %v1106 = vadd.f32 %v361, %v1096
      %v1107 = vmax.f32 %v1099, 0.0
      %v1108 = vmax.f32 %v1100, 0.0
      %v1109 = vmax.f32 %v1101, 0.0
      %v1110 = vmax.f32 %v1102, 0.0
      %v1111 = vmax.f32 %v1103, 0.0
      %v1112 = vmax.f32 %v1104, 0.0
      %v1113 = vmax.f32 %v1105, 0.0
      %v1114 = vmax.f32 %v1106, 0.0
      %s1115 = scalar_lea.vmem %s3, 128
      %v1116 = vld [vmem:[%s1115] sm:$0xff]
      %v1117 = vld [vmem:[%s1115 + $0x8] sm:$0xff]
      %v1118 = vld [vmem:[%s1115 + $0x10] sm:$0xff]
      %v1119 = vld [vmem:[%s1115 + $0x18] sm:$0xff]
      %v1121 = vsel %vm375, %v1107, 0
      %v1124 = vsel %vm375, %v1108, 0
      %v1127 = vsel %vm375, %v1109, 0
      %v1130 = vsel %vm375, %v1110, 0
      %v1133 = vsel %vm375, %v1111, 0
      %v1136 = vsel %vm375, %v1112, 0
      %v1139 = vsel %vm375, %v1113, 0
      %v1142 = vsel %vm375, %v1114, 0
      %1144 = vmatprep.subr.mxu0 0.0
      %1145 = vmatpush1.msra.mxu0 0.0
      %1146 = vmatprep.subr.mxu0 0.0
      %1147 = vmatpush1.msra.mxu0 0.0
      %1148 = vmatprep.subr.mxu0 0.0
      %1149 = vmatpush1.msra.mxu0 0.0
      %1150 = vmatprep.subr.mxu0 0.0
      %1151 = vmatpush1.msra.mxu0 0.0
      %1152 = vmatprep.subr.mxu0 0.0
      %1153 = vmatpush1.msra.mxu0 0.0
      %1154 = vmatprep.subr.mxu0 0.0
      %1155 = vmatpush1.msra.mxu0 0.0
      %1156 = vmatprep.subr.mxu0 0.0
      %1157 = vmatpush1.msra.mxu0 0.0
      %1158 = vmatprep.subr.mxu0 0.0
      %1159 = vmatpush1.msra.mxu0 0.0
      %1160 = vmatprep.subr.mxu0 0.0
      %1161 = vmatpush1.msra.mxu0 0.0
      %1162 = vmatprep.subr.mxu0 0.0
      %1163 = vmatpush1.msra.mxu0 0.0
      %1164 = vmatprep.subr.mxu0 0.0
      %1165 = vmatpush1.msra.mxu0 0.0
      %1166 = vmatprep.subr.mxu0 0.0
      %1167 = vmatpush1.msra.mxu0 0.0
      %1168 = vmatprep.subr.mxu0 0.0
      %1169 = vmatpush1.msra.mxu0 %v1119
      %1170 = vmatprep.subr.mxu0 0.0
      %1171 = vmatpush1.msra.mxu0 %v1118
      %1172 = vmatprep.subr.mxu0 0.0
      %1173 = vmatpush1.msra.mxu0 %v1117
      %1174 = vmatprep.subr.mxu0 0.0
      %1175 = vmatpush1.msra.mxu0 %v1116
      %1176 = vmatprep.subr.mxu0 0.0
      %1177 = vmatpush2.msra.mxu0 0.0
      %1178 = vmatprep.subr.mxu0 0.0
      %1179 = vmatpush2.msra.mxu0 0.0
      %1180 = vmatprep.subr.mxu0 0.0
      %1181 = vmatpush2.msra.mxu0 0.0
      %1182 = vmatprep.subr.mxu0 0.0
      %1183 = vmatpush2.msra.mxu0 0.0
      %1184 = vmatprep.subr.mxu0 0.0
      %1185 = vmatpush2.msra.mxu0 0.0
      %1186 = vmatprep.subr.mxu0 0.0
      %1187 = vmatpush2.msra.mxu0 0.0
      %1188 = vmatprep.subr.mxu0 0.0
      %1189 = vmatpush2.msra.mxu0 0.0
      %1190 = vmatprep.subr.mxu0 0.0
      %1191 = vmatpush2.msra.mxu0 0.0
      %1192 = vmatprep.subr.mxu0 0.0
      %1193 = vmatpush2.msra.mxu0 0.0
      %1194 = vmatprep.subr.mxu0 0.0
      %1195 = vmatpush2.msra.mxu0 0.0
      %1196 = vmatprep.subr.mxu0 0.0
      %1197 = vmatpush2.msra.mxu0 0.0
      %1198 = vmatprep.subr.mxu0 0.0
      %1199 = vmatpush2.msra.mxu0 0.0
      %1200 = vmatprep.subr.mxu0 0.0
      %1201 = vmatpush2.msra.mxu0 0.0
      %1202 = vmatprep.subr.mxu0 0.0
      %1203 = vmatpush2.msra.mxu0 0.0
      %1204 = vmatprep.subr.mxu0 0.0
      %1205 = vmatpush2.msra.mxu0 0.0
      %1206 = vmatprep.subr.mxu0 0.0
      %1207 = vmatpush2.msra.mxu0 0.0
      %1208 = vmatprep.mubr.f32.mxu0 0.0
      %1209 = vmatmul.mubr.f32.gmra.mxu0 %v1121
      %v1210 = vpop.f32.mrf.mxu0
      %v1211 = vadd.f32 0.0, %v1210
      %v1212 = vpop.f32.mrf.mxu0
      %1213 = vmatprep.mubr.f32.mxu0 0.0
      %1214 = vmatmul.mubr.f32.gmra.mxu0 %v1124
      %v1215 = vpop.f32.mrf.mxu0
      %v1216 = vadd.f32 0.0, %v1215
      %v1217 = vpop.f32.mrf.mxu0
      %1218 = vmatprep.mubr.f32.mxu0 0.0
      %1219 = vmatmul.mubr.f32.gmra.mxu0 %v1127
      %v1220 = vpop.f32.mrf.mxu0
      %v1221 = vadd.f32 0.0, %v1220
      %v1222 = vpop.f32.mrf.mxu0
      %1223 = vmatprep.mubr.f32.mxu0 0.0
      %1224 = vmatmul.mubr.f32.gmra.mxu0 %v1130
      %v1225 = vpop.f32.mrf.mxu0
      %v1226 = vadd.f32 0.0, %v1225
      %v1227 = vpop.f32.mrf.mxu0
      %1228 = vmatprep.mubr.f32.mxu0 0.0
      %1229 = vmatmul.mubr.f32.gmra.mxu0 %v1133
      %v1230 = vpop.f32.mrf.mxu0
      %v1231 = vadd.f32 0.0, %v1230
      %v1232 = vpop.f32.mrf.mxu0
      %1233 = vmatprep.mubr.f32.mxu0 0.0
      %1234 = vmatmul.mubr.f32.gmra.mxu0 %v1136
      %v1235 = vpop.f32.mrf.mxu0
      %v1236 = vadd.f32 0.0, %v1235
      %v1237 = vpop.f32.mrf.mxu0
      %1238 = vmatprep.mubr.f32.mxu0 0.0
      %1239 = vmatmul.mubr.f32.gmra.mxu0 %v1139
      %v1240 = vpop.f32.mrf.mxu0
      %v1241 = vadd.f32 0.0, %v1240
      %v1242 = vpop.f32.mrf.mxu0
      %1243 = vmatprep.mubr.f32.mxu0 0.0
      %1244 = vmatmul.mubr.f32.gmra.mxu0 %v1142
      %v1245 = vpop.f32.mrf.mxu0
      %v1246 = vadd.f32 0.0, %v1245
      %v1247 = vpop.f32.mrf.mxu0
      %1248 = vdwg.mxu0
      %1257 = vrot.lane.b32.xlu0 %v1211, 32
      %v1258 = vpop.permute.xlu0 %1257
      %1259 = vrot.lane.b32.xlu0 %v1216, 32
      %v1260 = vpop.permute.xlu0 %1259
      %1261 = vrot.lane.b32.xlu0 %v1221, 32
      %v1262 = vpop.permute.xlu0 %1261
      %1263 = vrot.lane.b32.xlu0 %v1226, 32
      %v1264 = vpop.permute.xlu0 %1263
      %1265 = vrot.lane.b32.xlu0 %v1231, 32
      %v1266 = vpop.permute.xlu0 %1265
      %1267 = vrot.lane.b32.xlu0 %v1236, 32
      %v1268 = vpop.permute.xlu0 %1267
      %1269 = vrot.lane.b32.xlu0 %v1241, 32
      %v1270 = vpop.permute.xlu0 %1269
      %1271 = vrot.lane.b32.xlu0 %v1246, 32
      %v1272 = vpop.permute.xlu0 %1271
      %v1281 = vadd.f32 %v319, %v1258
      %v1282 = vadd.f32 %v325, %v1260
      %v1283 = vadd.f32 %v331, %v1262
      %v1284 = vadd.f32 %v337, %v1264
      %v1285 = vadd.f32 %v343, %v1266
      %v1286 = vadd.f32 %v349, %v1268
      %v1287 = vadd.f32 %v355, %v1270
      %v1288 = vadd.f32 %v361, %v1272
      %v1289 = vsub.f32 0.0, %v1281
      %v1290 = vsub.f32 0.0, %v1282
      %v1291 = vsub.f32 0.0, %v1283
      %v1292 = vsub.f32 0.0, %v1284
      %v1293 = vsub.f32 0.0, %v1285
      %v1294 = vsub.f32 0.0, %v1286
      %v1295 = vsub.f32 0.0, %v1287
      %v1296 = vsub.f32 0.0, %v1288
      %v1297 = vmul.f32 %v1289, 1.442695
      %v1298 = vpow.pop %v1297
      %v1299 = vmul.f32 %v1290, 1.442695
      %v1300 = vpow.pop %v1299
      %v1301 = vmul.f32 %v1291, 1.442695
      %v1302 = vpow.pop %v1301
      %v1303 = vmul.f32 %v1292, 1.442695
      %v1304 = vpow.pop %v1303
      %v1305 = vmul.f32 %v1293, 1.442695
      %v1306 = vpow.pop %v1305
      %v1307 = vmul.f32 %v1294, 1.442695
      %v1308 = vpow.pop %v1307
      %v1309 = vmul.f32 %v1295, 1.442695
      %v1310 = vpow.pop %v1309
      %v1311 = vmul.f32 %v1296, 1.442695
      %v1312 = vpow.pop %v1311
      %v1313 = vadd.f32 %v1298, 1.0
      %v1314 = vadd.f32 %v1300, 1.0
      %v1315 = vadd.f32 %v1302, 1.0
      %v1316 = vadd.f32 %v1304, 1.0
      %v1317 = vadd.f32 %v1306, 1.0
      %v1318 = vadd.f32 %v1308, 1.0
      %v1319 = vadd.f32 %v1310, 1.0
      %v1320 = vadd.f32 %v1312, 1.0
      %v1321 = vrcp.pop %v1313
      %v1322 = vrcp.pop %v1314
      %v1323 = vrcp.pop %v1315
      %v1324 = vrcp.pop %v1316
      %v1325 = vrcp.pop %v1317
      %v1326 = vrcp.pop %v1318
      %v1327 = vrcp.pop %v1319
      %v1328 = vrcp.pop %v1320
      %1337 = vrot.lane.b32.xlu0 %v1321, 96
      %v1338 = vpop.permute.xlu0 %1337
      %1339 = vrot.lane.b32.xlu0 %v1322, 96
      %v1340 = vpop.permute.xlu0 %1339
      %1341 = vrot.lane.b32.xlu0 %v1323, 96
      %v1342 = vpop.permute.xlu0 %1341
      %1343 = vrot.lane.b32.xlu0 %v1324, 96
      %v1344 = vpop.permute.xlu0 %1343
      %1345 = vrot.lane.b32.xlu0 %v1325, 96
      %v1346 = vpop.permute.xlu0 %1345
      %1347 = vrot.lane.b32.xlu0 %v1326, 96
      %v1348 = vpop.permute.xlu0 %1347
      %1349 = vrot.lane.b32.xlu0 %v1327, 96
      %v1350 = vpop.permute.xlu0 %1349
      %1351 = vrot.lane.b32.xlu0 %v1328, 96
      %v1352 = vpop.permute.xlu0 %1351
      %1361 = vst.msk [vmem:[%s199] sm:$0xff] %vm375, %v1338
      %1362 = vst.msk [vmem:[%s199 + $0x8] sm:$0xff] %vm375, %v1340
      %1363 = vst.msk [vmem:[%s199 + $0x10] sm:$0xff] %vm375, %v1342
      %1364 = vst.msk [vmem:[%s199 + $0x18] sm:$0xff] %vm375, %v1344
      %1365 = vst.msk [vmem:[%s199 + $0x20] sm:$0xff] %vm375, %v1346
      %1366 = vst.msk [vmem:[%s199 + $0x28] sm:$0xff] %vm375, %v1348
      %1367 = vst.msk [vmem:[%s199 + $0x30] sm:$0xff] %vm375, %v1350
      %1368 = vst.msk [vmem:[%s199 + $0x38] sm:$0xff] %vm375, %v1352
      %s1369 = smul.u32 8, %s15
      %p1370 = scmp.lt.s32.totalorder %s1369, 31
      %s1371 = scalar_select %p1370, %s1369, 31
      %s1372 = smul.addr %s1371, 8
      %s1373 = scalar_lea.vmem %s4, %s1372
      // Predicated region
      $region37: #{tpu_custom_call.1} parent=35 // pred_check
        %p1374 = pneg %p122
      $region38: #{tpu_custom_call.1} parent=35 // pred_check_branch
        %1376 = sbr.rel (%p1374) target = $region40
      $region39: #{tpu_custom_call.1} parent=35 // pred_region
        %s1377 = smul.u32 8, %s15
      $region40: #{tpu_custom_call.1} parent=35 // pred_fallthru
        _
    $region36: #{tpu_custom_call.1} parent=5 // pred_fallthru
      _
    %p1378 = scmp.le.s32.totalorder 2, %s10
    // Predicated region
    $region41: #{tpu_custom_call.1} parent=5 // pred_check
      %p1379 = pneg %p1378
    $region42: #{tpu_custom_call.1} parent=5 // pred_check_branch
      %1381 = sbr.rel (%p1379) target = $region44
    $region43: #{tpu_custom_call.1} parent=5 // pred_region
      %s1382 = ssub.s32 %s10, 2
      // Predicated region
      $region45: #{tpu_custom_call.1} parent=43 // pred_check
        %p1383 = pneg %p128
      $region46: #{tpu_custom_call.1} parent=43 // pred_check_branch
        %1385 = sbr.rel (%p1383) target = $region48
      $region47: #{tpu_custom_call.1} parent=43 // pred_region
        %s1386 = smul.u32 8, %s16
        %p1387 = scmp.lt.s32.totalorder %s1386, 31
        %s1388 = scalar_select %p1387, %s1386, 31
        %s1389 = smul.addr %s1388, 8
        %s1390 = scalar_lea.vmem %s4, %s1389
      $region48: #{tpu_custom_call.1} parent=43 // pred_fallthru
        _
    $region44: #{tpu_custom_call.1} parent=5 // pred_fallthru
      _
  $region6: #{tpu_custom_call.1} parent=0 // loop_footer
    %s14 = sadd.s32 1, %s10
  $region7: #{tpu_custom_call.1} parent=0 // loop_footer_branch
    %9 = sbr.rel target = $region3
  $region8: #{tpu_custom_call.1} parent=0 // loop_exit
    _

</llo_original>
